<compile_context>
chip_gen: v7x
topology: tpu7x:2x2x1
jax: 0.10.0
libtpu: 0.0.40
codegen_flags: <defaults>
</compile_context>

<pallas_src>
import jax
import jax.numpy as jnp
from jax.experimental import pallas as pl
from jax.experimental.pallas import tpu as pltpu


# ----------------------------------------------------------------------------
# Tunables
# ----------------------------------------------------------------------------
_MIN_PALLAS_BYTES = 2 * 1024 * 1024     # below this, XLA slices fuse & win (pure-copy op)
_TARGET_BLOCK_BYTES = 4 * 1024 * 1024   # roofline fraction plateaus (~85-86%) past this
_MIN_GRID_STEPS = 4                     # DMA overlap + v7x 2-TensorCore sharding


def _sublane_min(dtype):
    # Minimum packed sublane tile per dtype (8 rows f32, 16 bf16, 32 int8/fp8).
    itemsize = jnp.dtype(dtype).itemsize
    return max(8, 32 // itemsize)


def _round_up(x, m):
    return -(-x // m) * m


def _round_dn(x, m):
    return (x // m) * m


def _vmem_limit_bytes():
    """Generation-aware VMEM limit: 128 MiB physical on v5e/v6e, 64 MiB/TC on v7x."""
    try:
        cap = int(pltpu.get_tpu_info().vmem_capacity_bytes)
    except Exception:
        cap = 64 * 1024 * 1024          # conservative default (v7x per-TC size)
    # Leave headroom for Mosaic's internal scratch; never ask for more than 96 MiB.
    return int(min(cap * 3 // 4, 96 * 1024 * 1024))


# ----------------------------------------------------------------------------
# Pallas kernel: split the last (lane) dimension into static chunks
# ----------------------------------------------------------------------------
def _make_split_kernel(starts, sizes):
    # Static (compile-time) column offsets; one output ref per split chunk.
    # All starts/sizes are multiples of 128, so every store is an unmasked,
    # lane-dense vst.
    def kernel(x_ref, *out_refs):
        for out_ref, s0, sz in zip(out_refs, starts, sizes):
            out_ref[...] = x_ref[:, s0:s0 + sz]
    return kernel


def _pick_row_block(B, D, dtype, budget_bytes):
    """Pick a row tile TB such that the double-buffered input+output blocks
    (~4*TB*D*itemsize) fit in `budget_bytes`, with >= _MIN_GRID_STEPS grid
    steps and ~_TARGET_BLOCK_BYTES per block.

    Returns None if even a minimum (sublane_min x D) tile overflows the budget
    (caller falls back to XLA slices)."""
    itemsize = jnp.dtype(dtype).itemsize
    sub = _sublane_min(dtype)
    bytes_per_row = 4 * D * itemsize          # 2 bufs * (input row + sum of output rows)

    max_tb = _round_dn(budget_bytes // bytes_per_row, sub)
    if max_tb < sub:
        return None                            # even the minimum tile won't fit -> XLA

    if B <= sub:
        return B                               # full-extent block, single step

    # ~4 MiB blocks: beyond that extra VMEM buys nothing for a pure-bandwidth copy,
    # so spend the rest on pipeline depth / headroom instead.
    target_tb = max(_round_dn(_TARGET_BLOCK_BYTES // (D * itemsize), sub), sub)
    # At least _MIN_GRID_STEPS grid steps so prefetch/writeback overlap and the
    # "parallel" batch axis actually shards across v7x's two TensorCores.
    steps_tb = _round_up(pl.cdiv(B, _MIN_GRID_STEPS), sub)

    tb = max(min(max_tb, target_tb, steps_tb), sub)
    return int(tb)


def _pallas_split_lastdim(nn_output, split_sizes):
    """torch.split along dim=-1 for a 2-D [batch, features] tensor via Pallas."""
    B, D = nn_output.shape
    dtype = nn_output.dtype
    itemsize = jnp.dtype(dtype).itemsize

    vmem_limit = _vmem_limit_bytes()
    budget = int(0.85 * vmem_limit)            # block budget consistent with the limit
    TB = _pick_row_block(B, D, dtype, budget)
    if TB is None:
        # Feature dim too wide for even a minimum row tile: contiguous XLA slices.
        # TODO(synk): could column-tile the chunks instead of falling back.
        return _xla_split(nn_output, split_sizes, 1)

    starts = [0]
    for s in split_sizes[:-1]:
        starts.append(starts[-1] + s)

    grid = (pl.cdiv(B, TB),)
    kernel = _make_split_kernel(tuple(starts), tuple(split_sizes))

    out_shape = tuple(
        jax.ShapeDtypeStruct((B, s), dtype) for s in split_sizes
    )
    out_specs = tuple(
        pl.BlockSpec((TB, s), lambda i: (i, 0)) for s in split_sizes
    )

    outs = pl.pallas_call(
        kernel,
        out_shape=out_shape,
        grid=grid,
        in_specs=[pl.BlockSpec((TB, D), lambda i: (i, 0))],
        out_specs=out_specs,
        compiler_params=pltpu.CompilerParams(
            dimension_semantics=("parallel",),   # shard batch across TCs (v7x)
            vmem_limit_bytes=vmem_limit,         # generation-aware, matches budget
        ),
        cost_estimate=pl.CostEstimate(
            flops=0,
            transcendentals=0,
            bytes_accessed=2 * B * D * itemsize,  # pure-bandwidth op
        ),
    )(nn_output)
    return tuple(outs)


# ----------------------------------------------------------------------------
# Fallback: plain XLA slices (contiguous DMAs that fuse into consumers; used
# for dim=0 splits, small tensors, tiny/misaligned chunks, or non-2D tensors)
# ----------------------------------------------------------------------------
def _xla_split(x, split_sizes, dim):
    dim = dim % x.ndim
    outs = []
    off = 0
    for s in split_sizes:
        idx = [slice(None)] * x.ndim
        idx[dim] = slice(off, off + s)
        outs.append(x[tuple(idx)])
        off += s
    return tuple(outs)


def split_like_torch(nn_output, split_sizes, split_dim):
    """torch.split(nn_output, split_sizes, dim=split_dim) equivalent."""
    split_sizes = list(split_sizes)
    d = split_dim % nn_output.ndim
    assert sum(split_sizes) == nn_output.shape[d], \
        "split sizes must sum to the split dimension"

    use_pallas = False
    if nn_output.ndim == 2 and d == 1 and len(split_sizes) > 1:
        B, D = nn_output.shape
        itemsize = jnp.dtype(nn_output.dtype).itemsize
        lane_aligned = all(s > 0 and s % 128 == 0 for s in split_sizes)
        big_enough = B * D * itemsize >= _MIN_PALLAS_BYTES
        enough_rows = B >= 2 * _sublane_min(nn_output.dtype)   # >= 2 grid steps possible
        use_pallas = lane_aligned and big_enough and enough_rows

    if use_pallas:
        return _pallas_split_lastdim(nn_output, tuple(split_sizes))
    return _xla_split(nn_output, split_sizes, d)


# ----------------------------------------------------------------------------
# BaseNetworkClass equivalent (the abstract base class defines no parameters)
# ----------------------------------------------------------------------------
class BaseNetworkClass:
    def __init__(self, output_split_sizes):
        self.output_split_sizes = output_split_sizes

    def _get_correct_nn_output_format(self, nn_output, split_dim):
        if self.output_split_sizes is not None:
            return split_like_torch(nn_output, self.output_split_sizes, split_dim)
        # Identity branch: zero-cost pass-through, no HBM->VMEM->HBM round trip.
        return nn_output

    def _apply_spectral_norm(self):
        # TODO(synk): spectral_norm mutates submodule weights; the abstract base
        # class owns no weights, so there is nothing to normalize here.
        pass

    def forward(self, x):
        raise NotImplementedError("Define in child classes.")


# ----------------------------------------------------------------------------
# Demo / self-check
# ----------------------------------------------------------------------------
if __name__ == "__main__":
    key = jax.random.PRNGKey(0)

    # --- Case 1: large-enough, lane-aligned split along dim=1 -> Pallas path --
    # 2048 x 512 f32 = 4 MiB (>= the 2 MiB gate), 128-aligned chunks.
    B1, D1 = 2048, 512
    split_big = [256, 256]
    x_big = jax.random.normal(key, (B1, D1), dtype=jnp.float32)
    net_big = BaseNetworkClass(split_big)
    big_chunks = jax.block_until_ready(
        net_big._get_correct_nn_output_format(x_big, split_dim=1))
    off = 0
    for chunk, sz in zip(big_chunks, split_big):
        assert chunk.shape == (B1, sz)
        assert jnp.allclose(chunk, x_big[:, off:off + sz])
        off += sz

    # --- Case 2: small lane-aligned split -> below size gate -> XLA fallback --
    batch, hidden = 8, 256
    split_small = [128, 128]
    nn_output = jax.random.normal(jax.random.PRNGKey(1), (batch, hidden),
                                  dtype=jnp.float32)
    net = BaseNetworkClass(split_small)
    chunks = jax.block_until_ready(
        net._get_correct_nn_output_format(nn_output, split_dim=1))
    off = 0
    for chunk, sz in zip(chunks, split_small):
        assert chunk.shape == (batch, sz)
        assert jnp.allclose(chunk, nn_output[:, off:off + sz])
        off += sz

    # --- Case 3: tiny / misaligned splits -> XLA-slice fallback ---------------
    small = jax.random.normal(jax.random.PRNGKey(2), (2, 32), dtype=jnp.float32)
    net_small = BaseNetworkClass([16, 8, 8])
    small_chunks = jax.block_until_ready(
        net_small._get_correct_nn_output_format(small, split_dim=1))
    off = 0
    for chunk, sz in zip(small_chunks, [16, 8, 8]):
        assert chunk.shape == (2, sz)
        assert jnp.allclose(chunk, small[:, off:off + sz])
        off += sz

    # --- Case 4: dim=0 split -> contiguous-row slices (no transpose) ----------
    net_rows = BaseNetworkClass([5, 3])
    row_chunks = jax.block_until_ready(
        net_rows._get_correct_nn_output_format(nn_output, split_dim=0))
    off = 0
    for chunk, sz in zip(row_chunks, [5, 3]):
        assert chunk.shape == (sz, hidden)
        assert jnp.allclose(chunk, nn_output[off:off + sz, :])
        off += sz

    # --- Case 5: output_split_sizes is None -> identity (no kernel, no copy) --
    net_none = BaseNetworkClass(None)
    out = net_none._get_correct_nn_output_format(nn_output, split_dim=1)
    out = jax.block_until_ready(out)
    assert out.shape == nn_output.shape
    assert jnp.allclose(out, nn_output)

    # forward stays abstract, exactly as in the reference module.
    try:
        net.forward(nn_output)
        raise AssertionError("forward should be abstract")
    except NotImplementedError:
        pass

    print("KERNEL_OK")
</pallas_src>

<mosaic_0001>
module attributes {stable_mosaic.version = 11 : i64} {
  func.func @kernel(%arg0: i32, %arg1: memref<512x512xf32, #tpu.memory_space<vmem>>, %arg2: memref<512x256xf32, #tpu.memory_space<vmem>>, %arg3: memref<512x256xf32, #tpu.memory_space<vmem>>) attributes {dimension_semantics = [#tpu.dimension_semantics<parallel>], iteration_bounds = array<i64: 4>, scalar_prefetch = 0 : i64, scratch_operands = 0 : i64, tpu.core_type = #tpu.core_type<tc>, window_params = [{transform_indices = @transform_0, window_bounds = array<i64: 512, 512>}, {transform_indices = @transform_1, window_bounds = array<i64: 512, 256>}, {transform_indices = @transform_2, window_bounds = array<i64: 512, 256>}]} {
    %c0 = arith.constant 0 : index
    %c0_0 = arith.constant 0 : index
    %0 = vector.load %arg1[%c0, %c0_0] : memref<512x512xf32, #tpu.memory_space<vmem>>, vector<512x256xf32>
    %c0_1 = arith.constant 0 : index
    %c0_2 = arith.constant 0 : index
    %1 = vector.load %arg2[%c0_1, %c0_2] : memref<512x256xf32, #tpu.memory_space<vmem>>, vector<512x256xf32>
    tpu.vector_store %arg2[%c0_1, %c0_2], %0 {strides = array<i32>} : memref<512x256xf32, #tpu.memory_space<vmem>>, vector<512x256xf32>,
    %c0_3 = arith.constant 0 : index
    %c256 = arith.constant 256 : index
    %2 = vector.load %arg1[%c0_3, %c256] : memref<512x512xf32, #tpu.memory_space<vmem>>, vector<512x256xf32>
    %c0_4 = arith.constant 0 : index
    %c0_5 = arith.constant 0 : index
    %3 = vector.load %arg3[%c0_4, %c0_5] : memref<512x256xf32, #tpu.memory_space<vmem>>, vector<512x256xf32>
    tpu.vector_store %arg3[%c0_4, %c0_5], %2 {strides = array<i32>} : memref<512x256xf32, #tpu.memory_space<vmem>>, vector<512x256xf32>,
    return
  }
  func.func @transform_0(%arg0: i32) -> (i32, i32) {
    %c0_i32 = arith.constant 0 : i32
    %c0_i32_0 = arith.constant 0 : i32
    return %arg0, %c0_i32 : i32, i32
  }
  func.func @transform_1(%arg0: i32) -> (i32, i32) {
    %c0_i32 = arith.constant 0 : i32
    %c0_i32_0 = arith.constant 0 : i32
    return %arg0, %c0_i32 : i32, i32
  }
  func.func @transform_2(%arg0: i32) -> (i32, i32) {
    %c0_i32 = arith.constant 0 : i32
    %c0_i32_0 = arith.constant 0 : i32
    return %arg0, %c0_i32 : i32, i32
  }
}

</mosaic_0001>

<llo_original>
// kernel: tpu_custom_call.1
$region0: #{tpu_custom_call.1}
  #allocation0 [shape = 'u32[]', space=smem, size = 0x4, offset = 0x4, fixed_abs, tag = 'smem constant byte address 0x4 - core index']
  #allocation1 [shape = 'u32[144,128]{1,0:T(1,128)}', space=vmem, size = 0x12000, scoped, tag = 'internal scratch']
  %s0 = inlined_call_operand.hbm [shape: f32[2048,512], index: 0, kind: input, shape index: {}]
  %s1 = inlined_call_operand.hbm [shape: f32[2048,256], index: 1, kind: output, shape index: {0}]
  %s2 = inlined_call_operand.hbm [shape: f32[2048,256], index: 2, kind: output, shape index: {1}]
  %3 = xla_tuple %s1, %s2
  %s4 = sld [smem:[#allocation0]]
  $region49: #{tpu_custom_call.1} parent=0
    _
  %s6 = ssub.s32 1, %s4
  %s7 = scalar_select 0, %s6, %s4
  $region1: #{tpu_custom_call.1} parent=0
    #allocation2 [shape = 'u8[2097152]{0}', space=vmem, size = 0x200000, scoped, tag = 'input window, operand 0']
    #allocation3 [shape = 's32[2]{0}', space=sflag, size = 0x8, scoped, tag = 'scoped memory for tpu_custom_call.1']
    #allocation4 [shape = 's32[2]{0}', space=sflag, size = 0x8, scoped, tag = 'scoped memory for tpu_custom_call.1']
    #allocation5 [shape = 'u8[1048576]{0}', space=vmem, size = 0x100000, scoped, tag = 'output window, operand 0']
    #allocation6 [shape = 'u8[1048576]{0}', space=vmem, size = 0x100000, scoped, tag = 'output window, operand 1']
    #allocation7 [shape = 's32[2]{0}', space=sflag, size = 0x8, scoped, tag = 'scoped memory for tpu_custom_call.1']
    %8 = vsyncpa [#allocation3], 0
    %s9 = scalar_lea.sflag [#allocation3], 1
    %10 = vsyncpa %s9, 0
    %11 = vsyncpa [#allocation4], 0
    %s12 = scalar_lea.sflag [#allocation4], 1
    %13 = vsyncpa %s12, 0
    %14 = vsyncpa [#allocation7], 0
    %s15 = scalar_lea.sflag [#allocation7], 1
    %16 = vsyncpa %s15, 0
    loop: start=0, step=1, limit=6
    $region2: #{tpu_custom_call.1} parent=1 // loop_pre_header
      _
    $region3: #{tpu_custom_call.1} parent=1 // loop_header
      %s18 = sphi 0, %s22
      %p19 = scmp.ge.s32.totalorder %s18, 6
      %s28 = sphi 0, %s30
      %s31 = sphi 0, %s28
      %s32 = sphi 0, %s31
      %s48 = sphi 0, %s32
      %s54 = sphi 0, %s56
      %s57 = sphi 0, %s54
      %s58 = sphi 0, %s57
      %s74 = sphi 0, %s58
      %s80 = sphi 0, %s82
      %s83 = sphi 0, %s80
      %s84 = sphi 0, %s83
      %s100 = sphi 0, %s84
    $region4: #{tpu_custom_call.1} parent=1 // loop_header_branch
      %21 = sbr.rel (%p19) target = $region8
    $region5: #{tpu_custom_call.1} parent=1 // loop_body
      %s23 = ssub.s32 %s18, 1
      %s24 = ssub.s32 %s18, 2
      %s25 = sadd.s32 %s18, 1
      %s26 = ssub.s32 %s18, %s25
      %p27 = scmp.eq.s32.totalorder %s26, 0
      %s29 = sadd.s32 %s28, 1
      %s30 = scalar_select %p27, %s28, %s29
      %p33 = pneg %p27
      %p34 = scmp.eq.s32.totalorder %s18, 3
      %p35 = por %p33, %p34
      %p36 = scmp.ne.s32.totalorder %s28, %s31
      %p37 = scmp.eq.s32.totalorder %s18, 0
      %p38 = por %p36, %p37
      %p39 = scmp.ne.s32.totalorder %s28, %s31
      %p40 = scmp.eq.s32.totalorder %s23, 3
      %p41 = por %p39, %p40
      %p42 = scmp.ne.s32.totalorder %s31, %s32
      %p43 = scmp.eq.s32.totalorder %s23, 0
      %p44 = por %p42, %p43
      %p45 = scmp.ne.s32.totalorder %s31, %s32
      %p46 = scmp.eq.s32.totalorder %s24, 3
      %p47 = por %p45, %p46
      %p49 = scmp.ne.s32.totalorder %s32, %s48
      %p50 = scmp.eq.s32.totalorder %s24, 0
      %p51 = por %p49, %p50
      %s52 = ssub.s32 %s18, %s25
      %p53 = scmp.eq.s32.totalorder %s52, 0
      %s55 = sadd.s32 %s54, 1
      %s56 = scalar_select %p53, %s54, %s55
      %p59 = pneg %p53
      %p60 = scmp.eq.s32.totalorder %s18, 3
      %p61 = por %p59, %p60
      %p62 = scmp.ne.s32.totalorder %s54, %s57
      %p63 = scmp.eq.s32.totalorder %s18, 0
      %p64 = por %p62, %p63
      %p65 = scmp.ne.s32.totalorder %s54, %s57
      %p66 = scmp.eq.s32.totalorder %s23, 3
      %p67 = por %p65, %p66
      %p68 = scmp.ne.s32.totalorder %s57, %s58
      %p69 = scmp.eq.s32.totalorder %s23, 0
      %p70 = por %p68, %p69
      %p71 = scmp.ne.s32.totalorder %s57, %s58
      %p72 = scmp.eq.s32.totalorder %s24, 3
      %p73 = por %p71, %p72
      %p75 = scmp.ne.s32.totalorder %s58, %s74
      %p76 = scmp.eq.s32.totalorder %s24, 0
      %p77 = por %p75, %p76
      %s78 = ssub.s32 %s18, %s25
      %p79 = scmp.eq.s32.totalorder %s78, 0
      %s81 = sadd.s32 %s80, 1
      %s82 = scalar_select %p79, %s80, %s81
      %p85 = pneg %p79
      %p86 = scmp.eq.s32.totalorder %s18, 3
      %p87 = por %p85, %p86
      %p88 = scmp.ne.s32.totalorder %s80, %s83
      %p89 = scmp.eq.s32.totalorder %s18, 0
      %p90 = por %p88, %p89
      %p91 = scmp.ne.s32.totalorder %s80, %s83
      %p92 = scmp.eq.s32.totalorder %s23, 3
      %p93 = por %p91, %p92
      %p94 = scmp.ne.s32.totalorder %s83, %s84
      %p95 = scmp.eq.s32.totalorder %s23, 0
      %p96 = por %p94, %p95
      %p97 = scmp.ne.s32.totalorder %s83, %s84
      %p98 = scmp.eq.s32.totalorder %s24, 3
      %p99 = por %p97, %p98
      %p101 = scmp.ne.s32.totalorder %s84, %s100
      %p102 = scmp.eq.s32.totalorder %s24, 0
      %p103 = por %p101, %p102
      %p104 = scmp.le.s32.totalorder 1, %s18
      %p105 = scmp.lt.s32.totalorder %s18, 5
      %p106 = pnand %p104, %p105
      %p107 = pneg %p106
      // Predicated region
      $region9: #{tpu_custom_call.1} parent=5 // pred_check
        _
      $region10: #{tpu_custom_call.1} parent=5 // pred_check_branch
        %109 = sbr.rel (%p106) target = $region12
      $region11: #{tpu_custom_call.1} parent=5 // pred_region
        %s110 = ssub.s32 %s18, 1
      $region12: #{tpu_custom_call.1} parent=5 // pred_fallthru
        _
      %p111 = scmp.lt.s32.totalorder %s18, 4
      // Predicated region
      $region13: #{tpu_custom_call.1} parent=5 // pred_check
        %p112 = pneg %p111
      $region14: #{tpu_custom_call.1} parent=5 // pred_check_branch
        %114 = sbr.rel (%p112) target = $region16
      $region15: #{tpu_custom_call.1} parent=5 // pred_region
        // Predicated region
        $region17: #{tpu_custom_call.1} parent=15 // pred_check
          %p115 = pneg %p38
        $region18: #{tpu_custom_call.1} parent=15 // pred_check_branch
          %117 = sbr.rel (%p115) target = $region20
        $region19: #{tpu_custom_call.1} parent=15 // pred_region
          %s118 = sand.u32 %s28, 1
          %s119 = scalar_lea.sflag [#allocation3], %s118
          %s120 = sand.u32 %s28, 1
          %s121 = smul.addr %s120, 2048
          %s122 = scalar_lea.vmem [#allocation2], %s121
          %s123 = smul.u32 64, %s18
          %s125 = ssub.s32 32768, 32768
          %126 = vsyncadd %s119, %s125
          %s127 = smul.addr %s123, 4
          %s128 = smul.addr %s127, 128
          %s129 = scalar_lea.hbm %s0, %s128
          %s130 = sshll.u32 %s122, 4
          %s131 = int_to_ptr.vmem [resolvable:$true] %s130
          %136 = dma.hbm_to_vmem [thread:$0]  %s129, 32768, %s131, %s119, 512, 512, 32
        $region20: #{tpu_custom_call.1} parent=15 // pred_fallthru
          _
      $region16: #{tpu_custom_call.1} parent=5 // pred_fallthru
        _
      %p137 = scmp.le.s32.totalorder 1, %s18
      %p138 = scmp.lt.s32.totalorder %s18, 5
      %p139 = pnand %p137, %p138
      %p140 = pneg %p139
      // Predicated region
      $region21: #{tpu_custom_call.1} parent=5 // pred_check
        _
      $region22: #{tpu_custom_call.1} parent=5 // pred_check_branch
        %142 = sbr.rel (%p139) target = $region24
      $region23: #{tpu_custom_call.1} parent=5 // pred_region
        %s143 = ssub.s32 %s18, 1
        %s144 = sand.u32 %s31, 1
        %s145 = scalar_lea.sflag [#allocation3], %s144
        %s146 = sand.u32 %s31, 1
        %s147 = smul.addr %s146, 2048
        %s148 = scalar_lea.vmem [#allocation2], %s147
        // Predicated region
        $region25: #{tpu_custom_call.1} parent=23 // pred_check
          %p149 = pneg %p44
        $region26: #{tpu_custom_call.1} parent=23 // pred_check_branch
          %151 = sbr.rel (%p149) target = $region28
        $region27: #{tpu_custom_call.1} parent=23 // pred_region
          %152 = dma.done %s145, 32768
        $region28: #{tpu_custom_call.1} parent=23 // pred_fallthru
          _
        %s153 = sand.u32 %s31, 1
        %s154 = scalar_lea.sflag [#allocation3], %s153
        %s155 = sand.u32 %s31, 1
        %s156 = smul.addr %s155, 2048
        %s157 = scalar_lea.vmem [#allocation2], %s156
        %p158 = pneg %p44
        %p159 = pneg %p41
        %p160 = pneg %p70
        %p161 = pneg %p67
        %s162 = sand.u32 %s57, 1
        %s163 = scalar_lea.sflag [#allocation4], %s162
        %s164 = sand.u32 %s57, 1
        %s165 = smul.addr %s164, 1024
        %s166 = scalar_lea.vmem [#allocation5], %s165
        %p167 = pneg %p96
        %p168 = pneg %p93
        %s169 = sand.u32 %s83, 1
        %s170 = scalar_lea.sflag [#allocation7], %s169
        %s171 = sand.u32 %s83, 1
        %s172 = smul.addr %s171, 1024
        %s173 = scalar_lea.vmem [#allocation6], %s172
        %s174 = smul.u32 64, %s23
        %s175 = smul.u32 64, %s23
        %s176 = smul.u32 64, %s23
        %v177 = vld [vmem:[%s148] sm:$0xff]
        %v178 = vld [vmem:[%s148 + $0x8] sm:$0xff]
        %v179 = vld [vmem:[%s148 + $0x20] sm:$0xff]
        %v180 = vld [vmem:[%s148 + $0x28] sm:$0xff]
        %v181 = vld [vmem:[%s148 + $0x40] sm:$0xff]
        %v182 = vld [vmem:[%s148 + $0x48] sm:$0xff]
        %v183 = vld [vmem:[%s148 + $0x60] sm:$0xff]
        %v184 = vld [vmem:[%s148 + $0x68] sm:$0xff]
        %v185 = vld [vmem:[%s148 + $0x80] sm:$0xff]
        %v186 = vld [vmem:[%s148 + $0x88] sm:$0xff]
        %v187 = vld [vmem:[%s148 + $0xa0] sm:$0xff]
        %v188 = vld [vmem:[%s148 + $0xa8] sm:$0xff]
        %v189 = vld [vmem:[%s148 + $0xc0] sm:$0xff]
        %v190 = vld [vmem:[%s148 + $0xc8] sm:$0xff]
        %v191 = vld [vmem:[%s148 + $0xe0] sm:$0xff]
        %v192 = vld [vmem:[%s148 + $0xe8] sm:$0xff]
        %v193 = vld [vmem:[%s148 + $0x100] sm:$0xff]
        %v194 = vld [vmem:[%s148 + $0x108] sm:$0xff]
        %v195 = vld [vmem:[%s148 + $0x120] sm:$0xff]
        %v196 = vld [vmem:[%s148 + $0x128] sm:$0xff]
        %v197 = vld [vmem:[%s148 + $0x140] sm:$0xff]
        %v198 = vld [vmem:[%s148 + $0x148] sm:$0xff]
        %v199 = vld [vmem:[%s148 + $0x160] sm:$0xff]
        %v200 = vld [vmem:[%s148 + $0x168] sm:$0xff]
        %v201 = vld [vmem:[%s148 + $0x180] sm:$0xff]
        %v202 = vld [vmem:[%s148 + $0x188] sm:$0xff]
        %v203 = vld [vmem:[%s148 + $0x1a0] sm:$0xff]
        %v204 = vld [vmem:[%s148 + $0x1a8] sm:$0xff]
        %v205 = vld [vmem:[%s148 + $0x1c0] sm:$0xff]
        %v206 = vld [vmem:[%s148 + $0x1c8] sm:$0xff]
        %v207 = vld [vmem:[%s148 + $0x1e0] sm:$0xff]
        %v208 = vld [vmem:[%s148 + $0x1e8] sm:$0xff]
        %v209 = vld [vmem:[%s148 + $0x200] sm:$0xff]
        %v210 = vld [vmem:[%s148 + $0x208] sm:$0xff]
        %v211 = vld [vmem:[%s148 + $0x220] sm:$0xff]
        %v212 = vld [vmem:[%s148 + $0x228] sm:$0xff]
        %v213 = vld [vmem:[%s148 + $0x240] sm:$0xff]
        %v214 = vld [vmem:[%s148 + $0x248] sm:$0xff]
        %v215 = vld [vmem:[%s148 + $0x260] sm:$0xff]
        %v216 = vld [vmem:[%s148 + $0x268] sm:$0xff]
        %v217 = vld [vmem:[%s148 + $0x280] sm:$0xff]
        %v218 = vld [vmem:[%s148 + $0x288] sm:$0xff]
        %v219 = vld [vmem:[%s148 + $0x2a0] sm:$0xff]
        %v220 = vld [vmem:[%s148 + $0x2a8] sm:$0xff]
        %v221 = vld [vmem:[%s148 + $0x2c0] sm:$0xff]
        %v222 = vld [vmem:[%s148 + $0x2c8] sm:$0xff]
        %v223 = vld [vmem:[%s148 + $0x2e0] sm:$0xff]
        %v224 = vld [vmem:[%s148 + $0x2e8] sm:$0xff]
        %v225 = vld [vmem:[%s148 + $0x300] sm:$0xff]
        %v226 = vld [vmem:[%s148 + $0x308] sm:$0xff]
        %v227 = vld [vmem:[%s148 + $0x320] sm:$0xff]
        %v228 = vld [vmem:[%s148 + $0x328] sm:$0xff]
        %v229 = vld [vmem:[%s148 + $0x340] sm:$0xff]
        %v230 = vld [vmem:[%s148 + $0x348] sm:$0xff]
        %v231 = vld [vmem:[%s148 + $0x360] sm:$0xff]
        %v232 = vld [vmem:[%s148 + $0x368] sm:$0xff]
        %v233 = vld [vmem:[%s148 + $0x380] sm:$0xff]
        %v234 = vld [vmem:[%s148 + $0x388] sm:$0xff]
        %v235 = vld [vmem:[%s148 + $0x3a0] sm:$0xff]
        %v236 = vld [vmem:[%s148 + $0x3a8] sm:$0xff]
        %v237 = vld [vmem:[%s148 + $0x3c0] sm:$0xff]
        %v238 = vld [vmem:[%s148 + $0x3c8] sm:$0xff]
        %v239 = vld [vmem:[%s148 + $0x3e0] sm:$0xff]
        %v240 = vld [vmem:[%s148 + $0x3e8] sm:$0xff]
        %v241 = vld [vmem:[%s148 + $0x400] sm:$0xff]
        %v242 = vld [vmem:[%s148 + $0x408] sm:$0xff]
        %v243 = vld [vmem:[%s148 + $0x420] sm:$0xff]
        %v244 = vld [vmem:[%s148 + $0x428] sm:$0xff]
        %v245 = vld [vmem:[%s148 + $0x440] sm:$0xff]
        %v246 = vld [vmem:[%s148 + $0x448] sm:$0xff]
        %v247 = vld [vmem:[%s148 + $0x460] sm:$0xff]
        %v248 = vld [vmem:[%s148 + $0x468] sm:$0xff]
        %v249 = vld [vmem:[%s148 + $0x480] sm:$0xff]
        %v250 = vld [vmem:[%s148 + $0x488] sm:$0xff]
        %v251 = vld [vmem:[%s148 + $0x4a0] sm:$0xff]
        %v252 = vld [vmem:[%s148 + $0x4a8] sm:$0xff]
        %v253 = vld [vmem:[%s148 + $0x4c0] sm:$0xff]
        %v254 = vld [vmem:[%s148 + $0x4c8] sm:$0xff]
        %v255 = vld [vmem:[%s148 + $0x4e0] sm:$0xff]
        %v256 = vld [vmem:[%s148 + $0x4e8] sm:$0xff]
        %v257 = vld [vmem:[%s148 + $0x500] sm:$0xff]
        %v258 = vld [vmem:[%s148 + $0x508] sm:$0xff]
        %v259 = vld [vmem:[%s148 + $0x520] sm:$0xff]
        %v260 = vld [vmem:[%s148 + $0x528] sm:$0xff]
        %v261 = vld [vmem:[%s148 + $0x540] sm:$0xff]
        %v262 = vld [vmem:[%s148 + $0x548] sm:$0xff]
        %v263 = vld [vmem:[%s148 + $0x560] sm:$0xff]
        %v264 = vld [vmem:[%s148 + $0x568] sm:$0xff]
        %v265 = vld [vmem:[%s148 + $0x580] sm:$0xff]
        %v266 = vld [vmem:[%s148 + $0x588] sm:$0xff]
        %v267 = vld [vmem:[%s148 + $0x5a0] sm:$0xff]
        %v268 = vld [vmem:[%s148 + $0x5a8] sm:$0xff]
        %v269 = vld [vmem:[%s148 + $0x5c0] sm:$0xff]
        %v270 = vld [vmem:[%s148 + $0x5c8] sm:$0xff]
        %v271 = vld [vmem:[%s148 + $0x5e0] sm:$0xff]
        %v272 = vld [vmem:[%s148 + $0x5e8] sm:$0xff]
        %v273 = vld [vmem:[%s148 + $0x600] sm:$0xff]
        %v274 = vld [vmem:[%s148 + $0x608] sm:$0xff]
        %v275 = vld [vmem:[%s148 + $0x620] sm:$0xff]
        %v276 = vld [vmem:[%s148 + $0x628] sm:$0xff]
        %v277 = vld [vmem:[%s148 + $0x640] sm:$0xff]
        %v278 = vld [vmem:[%s148 + $0x648] sm:$0xff]
        %v279 = vld [vmem:[%s148 + $0x660] sm:$0xff]
        %v280 = vld [vmem:[%s148 + $0x668] sm:$0xff]
        %v281 = vld [vmem:[%s148 + $0x680] sm:$0xff]
        %v282 = vld [vmem:[%s148 + $0x688] sm:$0xff]
        %v283 = vld [vmem:[%s148 + $0x6a0] sm:$0xff]
        %v284 = vld [vmem:[%s148 + $0x6a8] sm:$0xff]
        %v285 = vld [vmem:[%s148 + $0x6c0] sm:$0xff]
        %v286 = vld [vmem:[%s148 + $0x6c8] sm:$0xff]
        %v287 = vld [vmem:[%s148 + $0x6e0] sm:$0xff]
        %v288 = vld [vmem:[%s148 + $0x6e8] sm:$0xff]
        %v289 = vld [vmem:[%s148 + $0x700] sm:$0xff]
        %v290 = vld [vmem:[%s148 + $0x708] sm:$0xff]
        %v291 = vld [vmem:[%s148 + $0x720] sm:$0xff]
        %v292 = vld [vmem:[%s148 + $0x728] sm:$0xff]
        %v293 = vld [vmem:[%s148 + $0x740] sm:$0xff]
        %v294 = vld [vmem:[%s148 + $0x748] sm:$0xff]
        %v295 = vld [vmem:[%s148 + $0x760] sm:$0xff]
        %v296 = vld [vmem:[%s148 + $0x768] sm:$0xff]
        %v297 = vld [vmem:[%s148 + $0x780] sm:$0xff]
        %v298 = vld [vmem:[%s148 + $0x788] sm:$0xff]
        %v299 = vld [vmem:[%s148 + $0x7a0] sm:$0xff]
        %v300 = vld [vmem:[%s148 + $0x7a8] sm:$0xff]
        %v301 = vld [vmem:[%s148 + $0x7c0] sm:$0xff]
        %v302 = vld [vmem:[%s148 + $0x7c8] sm:$0xff]
        %v303 = vld [vmem:[%s148 + $0x7e0] sm:$0xff]
        %v304 = vld [vmem:[%s148 + $0x7e8] sm:$0xff]
        %305 = vst [vmem:[%s166] sm:$0xff] %v177
        %306 = vst [vmem:[%s166 + $0x8] sm:$0xff] %v178
        %307 = vst [vmem:[%s166 + $0x10] sm:$0xff] %v179
        %308 = vst [vmem:[%s166 + $0x18] sm:$0xff] %v180
        %309 = vst [vmem:[%s166 + $0x20] sm:$0xff] %v181
        %310 = vst [vmem:[%s166 + $0x28] sm:$0xff] %v182
        %311 = vst [vmem:[%s166 + $0x30] sm:$0xff] %v183
        %312 = vst [vmem:[%s166 + $0x38] sm:$0xff] %v184
        %313 = vst [vmem:[%s166 + $0x40] sm:$0xff] %v185
        %314 = vst [vmem:[%s166 + $0x48] sm:$0xff] %v186
        %315 = vst [vmem:[%s166 + $0x50] sm:$0xff] %v187
        %316 = vst [vmem:[%s166 + $0x58] sm:$0xff] %v188
        %317 = vst [vmem:[%s166 + $0x60] sm:$0xff] %v189
        %318 = vst [vmem:[%s166 + $0x68] sm:$0xff] %v190
        %319 = vst [vmem:[%s166 + $0x70] sm:$0xff] %v191
        %320 = vst [vmem:[%s166 + $0x78] sm:$0xff] %v192
        %321 = vst [vmem:[%s166 + $0x80] sm:$0xff] %v193
        %322 = vst [vmem:[%s166 + $0x88] sm:$0xff] %v194
        %323 = vst [vmem:[%s166 + $0x90] sm:$0xff] %v195
        %324 = vst [vmem:[%s166 + $0x98] sm:$0xff] %v196
        %325 = vst [vmem:[%s166 + $0xa0] sm:$0xff] %v197
        %326 = vst [vmem:[%s166 + $0xa8] sm:$0xff] %v198
        %327 = vst [vmem:[%s166 + $0xb0] sm:$0xff] %v199
        %328 = vst [vmem:[%s166 + $0xb8] sm:$0xff] %v200
        %329 = vst [vmem:[%s166 + $0xc0] sm:$0xff] %v201
        %330 = vst [vmem:[%s166 + $0xc8] sm:$0xff] %v202
        %331 = vst [vmem:[%s166 + $0xd0] sm:$0xff] %v203
        %332 = vst [vmem:[%s166 + $0xd8] sm:$0xff] %v204
        %333 = vst [vmem:[%s166 + $0xe0] sm:$0xff] %v205
        %334 = vst [vmem:[%s166 + $0xe8] sm:$0xff] %v206
        %335 = vst [vmem:[%s166 + $0xf0] sm:$0xff] %v207
        %336 = vst [vmem:[%s166 + $0xf8] sm:$0xff] %v208
        %337 = vst [vmem:[%s166 + $0x100] sm:$0xff] %v209
        %338 = vst [vmem:[%s166 + $0x108] sm:$0xff] %v210
        %339 = vst [vmem:[%s166 + $0x110] sm:$0xff] %v211
        %340 = vst [vmem:[%s166 + $0x118] sm:$0xff] %v212
        %341 = vst [vmem:[%s166 + $0x120] sm:$0xff] %v213
        %342 = vst [vmem:[%s166 + $0x128] sm:$0xff] %v214
        %343 = vst [vmem:[%s166 + $0x130] sm:$0xff] %v215
        %344 = vst [vmem:[%s166 + $0x138] sm:$0xff] %v216
        %345 = vst [vmem:[%s166 + $0x140] sm:$0xff] %v217
        %346 = vst [vmem:[%s166 + $0x148] sm:$0xff] %v218
        %347 = vst [vmem:[%s166 + $0x150] sm:$0xff] %v219
        %348 = vst [vmem:[%s166 + $0x158] sm:$0xff] %v220
        %349 = vst [vmem:[%s166 + $0x160] sm:$0xff] %v221
        %350 = vst [vmem:[%s166 + $0x168] sm:$0xff] %v222
        %351 = vst [vmem:[%s166 + $0x170] sm:$0xff] %v223
        %352 = vst [vmem:[%s166 + $0x178] sm:$0xff] %v224
        %353 = vst [vmem:[%s166 + $0x180] sm:$0xff] %v225
        %354 = vst [vmem:[%s166 + $0x188] sm:$0xff] %v226
        %355 = vst [vmem:[%s166 + $0x190] sm:$0xff] %v227
        %356 = vst [vmem:[%s166 + $0x198] sm:$0xff] %v228
        %357 = vst [vmem:[%s166 + $0x1a0] sm:$0xff] %v229
        %358 = vst [vmem:[%s166 + $0x1a8] sm:$0xff] %v230
        %359 = vst [vmem:[%s166 + $0x1b0] sm:$0xff] %v231
        %360 = vst [vmem:[%s166 + $0x1b8] sm:$0xff] %v232
        %361 = vst [vmem:[%s166 + $0x1c0] sm:$0xff] %v233
        %362 = vst [vmem:[%s166 + $0x1c8] sm:$0xff] %v234
        %363 = vst [vmem:[%s166 + $0x1d0] sm:$0xff] %v235
        %364 = vst [vmem:[%s166 + $0x1d8] sm:$0xff] %v236
        %365 = vst [vmem:[%s166 + $0x1e0] sm:$0xff] %v237
        %366 = vst [vmem:[%s166 + $0x1e8] sm:$0xff] %v238
        %367 = vst [vmem:[%s166 + $0x1f0] sm:$0xff] %v239
        %368 = vst [vmem:[%s166 + $0x1f8] sm:$0xff] %v240
        %369 = vst [vmem:[%s166 + $0x200] sm:$0xff] %v241
        %370 = vst [vmem:[%s166 + $0x208] sm:$0xff] %v242
        %371 = vst [vmem:[%s166 + $0x210] sm:$0xff] %v243
        %372 = vst [vmem:[%s166 + $0x218] sm:$0xff] %v244
        %373 = vst [vmem:[%s166 + $0x220] sm:$0xff] %v245
        %374 = vst [vmem:[%s166 + $0x228] sm:$0xff] %v246
        %375 = vst [vmem:[%s166 + $0x230] sm:$0xff] %v247
        %376 = vst [vmem:[%s166 + $0x238] sm:$0xff] %v248
        %377 = vst [vmem:[%s166 + $0x240] sm:$0xff] %v249
        %378 = vst [vmem:[%s166 + $0x248] sm:$0xff] %v250
        %379 = vst [vmem:[%s166 + $0x250] sm:$0xff] %v251
        %380 = vst [vmem:[%s166 + $0x258] sm:$0xff] %v252
        %381 = vst [vmem:[%s166 + $0x260] sm:$0xff] %v253
        %382 = vst [vmem:[%s166 + $0x268] sm:$0xff] %v254
        %383 = vst [vmem:[%s166 + $0x270] sm:$0xff] %v255
        %384 = vst [vmem:[%s166 + $0x278] sm:$0xff] %v256
        %385 = vst [vmem:[%s166 + $0x280] sm:$0xff] %v257
        %386 = vst [vmem:[%s166 + $0x288] sm:$0xff] %v258
        %387 = vst [vmem:[%s166 + $0x290] sm:$0xff] %v259
        %388 = vst [vmem:[%s166 + $0x298] sm:$0xff] %v260
        %389 = vst [vmem:[%s166 + $0x2a0] sm:$0xff] %v261
        %390 = vst [vmem:[%s166 + $0x2a8] sm:$0xff] %v262
        %391 = vst [vmem:[%s166 + $0x2b0] sm:$0xff] %v263
        %392 = vst [vmem:[%s166 + $0x2b8] sm:$0xff] %v264
        %393 = vst [vmem:[%s166 + $0x2c0] sm:$0xff] %v265
        %394 = vst [vmem:[%s166 + $0x2c8] sm:$0xff] %v266
        %395 = vst [vmem:[%s166 + $0x2d0] sm:$0xff] %v267
        %396 = vst [vmem:[%s166 + $0x2d8] sm:$0xff] %v268
        %397 = vst [vmem:[%s166 + $0x2e0] sm:$0xff] %v269
        %398 = vst [vmem:[%s166 + $0x2e8] sm:$0xff] %v270
        %399 = vst [vmem:[%s166 + $0x2f0] sm:$0xff] %v271
        %400 = vst [vmem:[%s166 + $0x2f8] sm:$0xff] %v272
        %401 = vst [vmem:[%s166 + $0x300] sm:$0xff] %v273
        %402 = vst [vmem:[%s166 + $0x308] sm:$0xff] %v274
        %403 = vst [vmem:[%s166 + $0x310] sm:$0xff] %v275
        %404 = vst [vmem:[%s166 + $0x318] sm:$0xff] %v276
        %405 = vst [vmem:[%s166 + $0x320] sm:$0xff] %v277
        %406 = vst [vmem:[%s166 + $0x328] sm:$0xff] %v278
        %407 = vst [vmem:[%s166 + $0x330] sm:$0xff] %v279
        %408 = vst [vmem:[%s166 + $0x338] sm:$0xff] %v280
        %409 = vst [vmem:[%s166 + $0x340] sm:$0xff] %v281
        %410 = vst [vmem:[%s166 + $0x348] sm:$0xff] %v282
        %411 = vst [vmem:[%s166 + $0x350] sm:$0xff] %v283
        %412 = vst [vmem:[%s166 + $0x358] sm:$0xff] %v284
        %413 = vst [vmem:[%s166 + $0x360] sm:$0xff] %v285
        %414 = vst [vmem:[%s166 + $0x368] sm:$0xff] %v286
        %415 = vst [vmem:[%s166 + $0x370] sm:$0xff] %v287
        %416 = vst [vmem:[%s166 + $0x378] sm:$0xff] %v288
        %417 = vst [vmem:[%s166 + $0x380] sm:$0xff] %v289
        %418 = vst [vmem:[%s166 + $0x388] sm:$0xff] %v290
        %419 = vst [vmem:[%s166 + $0x390] sm:$0xff] %v291
        %420 = vst [vmem:[%s166 + $0x398] sm:$0xff] %v292
        %421 = vst [vmem:[%s166 + $0x3a0] sm:$0xff] %v293
        %422 = vst [vmem:[%s166 + $0x3a8] sm:$0xff] %v294
        %423 = vst [vmem:[%s166 + $0x3b0] sm:$0xff] %v295
        %424 = vst [vmem:[%s166 + $0x3b8] sm:$0xff] %v296
        %425 = vst [vmem:[%s166 + $0x3c0] sm:$0xff] %v297
        %426 = vst [vmem:[%s166 + $0x3c8] sm:$0xff] %v298
        %427 = vst [vmem:[%s166 + $0x3d0] sm:$0xff] %v299
        %428 = vst [vmem:[%s166 + $0x3d8] sm:$0xff] %v300
        %429 = vst [vmem:[%s166 + $0x3e0] sm:$0xff] %v301
        %430 = vst [vmem:[%s166 + $0x3e8] sm:$0xff] %v302
        %431 = vst [vmem:[%s166 + $0x3f0] sm:$0xff] %v303
        %432 = vst [vmem:[%s166 + $0x3f8] sm:$0xff] %v304
        %v433 = vld [vmem:[%s148 + $0x10] sm:$0xff]
        %v434 = vld [vmem:[%s148 + $0x18] sm:$0xff]
        %v435 = vld [vmem:[%s148 + $0x30] sm:$0xff]
        %v436 = vld [vmem:[%s148 + $0x38] sm:$0xff]
        %v437 = vld [vmem:[%s148 + $0x50] sm:$0xff]
        %v438 = vld [vmem:[%s148 + $0x58] sm:$0xff]
        %v439 = vld [vmem:[%s148 + $0x70] sm:$0xff]
        %v440 = vld [vmem:[%s148 + $0x78] sm:$0xff]
        %v441 = vld [vmem:[%s148 + $0x90] sm:$0xff]
        %v442 = vld [vmem:[%s148 + $0x98] sm:$0xff]
        %v443 = vld [vmem:[%s148 + $0xb0] sm:$0xff]
        %v444 = vld [vmem:[%s148 + $0xb8] sm:$0xff]
        %v445 = vld [vmem:[%s148 + $0xd0] sm:$0xff]
        %v446 = vld [vmem:[%s148 + $0xd8] sm:$0xff]
        %v447 = vld [vmem:[%s148 + $0xf0] sm:$0xff]
        %v448 = vld [vmem:[%s148 + $0xf8] sm:$0xff]
        %v449 = vld [vmem:[%s148 + $0x110] sm:$0xff]
        %v450 = vld [vmem:[%s148 + $0x118] sm:$0xff]
        %v451 = vld [vmem:[%s148 + $0x130] sm:$0xff]
        %v452 = vld [vmem:[%s148 + $0x138] sm:$0xff]
        %v453 = vld [vmem:[%s148 + $0x150] sm:$0xff]
        %v454 = vld [vmem:[%s148 + $0x158] sm:$0xff]
        %v455 = vld [vmem:[%s148 + $0x170] sm:$0xff]
        %v456 = vld [vmem:[%s148 + $0x178] sm:$0xff]
        %v457 = vld [vmem:[%s148 + $0x190] sm:$0xff]
        %v458 = vld [vmem:[%s148 + $0x198] sm:$0xff]
        %v459 = vld [vmem:[%s148 + $0x1b0] sm:$0xff]
        %v460 = vld [vmem:[%s148 + $0x1b8] sm:$0xff]
        %v461 = vld [vmem:[%s148 + $0x1d0] sm:$0xff]
        %v462 = vld [vmem:[%s148 + $0x1d8] sm:$0xff]
        %v463 = vld [vmem:[%s148 + $0x1f0] sm:$0xff]
        %v464 = vld [vmem:[%s148 + $0x1f8] sm:$0xff]
        %v465 = vld [vmem:[%s148 + $0x210] sm:$0xff]
        %v466 = vld [vmem:[%s148 + $0x218] sm:$0xff]
        %v467 = vld [vmem:[%s148 + $0x230] sm:$0xff]
        %v468 = vld [vmem:[%s148 + $0x238] sm:$0xff]
        %v469 = vld [vmem:[%s148 + $0x250] sm:$0xff]
        %v470 = vld [vmem:[%s148 + $0x258] sm:$0xff]
        %v471 = vld [vmem:[%s148 + $0x270] sm:$0xff]
        %v472 = vld [vmem:[%s148 + $0x278] sm:$0xff]
        %v473 = vld [vmem:[%s148 + $0x290] sm:$0xff]
        %v474 = vld [vmem:[%s148 + $0x298] sm:$0xff]
        %v475 = vld [vmem:[%s148 + $0x2b0] sm:$0xff]
        %v476 = vld [vmem:[%s148 + $0x2b8] sm:$0xff]
        %v477 = vld [vmem:[%s148 + $0x2d0] sm:$0xff]
        %v478 = vld [vmem:[%s148 + $0x2d8] sm:$0xff]
        %v479 = vld [vmem:[%s148 + $0x2f0] sm:$0xff]
        %v480 = vld [vmem:[%s148 + $0x2f8] sm:$0xff]
        %v481 = vld [vmem:[%s148 + $0x310] sm:$0xff]
        %v482 = vld [vmem:[%s148 + $0x318] sm:$0xff]
        %v483 = vld [vmem:[%s148 + $0x330] sm:$0xff]
        %v484 = vld [vmem:[%s148 + $0x338] sm:$0xff]
        %v485 = vld [vmem:[%s148 + $0x350] sm:$0xff]
        %v486 = vld [vmem:[%s148 + $0x358] sm:$0xff]
        %v487 = vld [vmem:[%s148 + $0x370] sm:$0xff]
        %v488 = vld [vmem:[%s148 + $0x378] sm:$0xff]
        %v489 = vld [vmem:[%s148 + $0x390] sm:$0xff]
        %v490 = vld [vmem:[%s148 + $0x398] sm:$0xff]
        %v491 = vld [vmem:[%s148 + $0x3b0] sm:$0xff]
        %v492 = vld [vmem:[%s148 + $0x3b8] sm:$0xff]
        %v493 = vld [vmem:[%s148 + $0x3d0] sm:$0xff]
        %v494 = vld [vmem:[%s148 + $0x3d8] sm:$0xff]
        %v495 = vld [vmem:[%s148 + $0x3f0] sm:$0xff]
        %v496 = vld [vmem:[%s148 + $0x3f8] sm:$0xff]
        %v497 = vld [vmem:[%s148 + $0x410] sm:$0xff]
        %v498 = vld [vmem:[%s148 + $0x418] sm:$0xff]
        %v499 = vld [vmem:[%s148 + $0x430] sm:$0xff]
        %v500 = vld [vmem:[%s148 + $0x438] sm:$0xff]
        %v501 = vld [vmem:[%s148 + $0x450] sm:$0xff]
        %v502 = vld [vmem:[%s148 + $0x458] sm:$0xff]
        %v503 = vld [vmem:[%s148 + $0x470] sm:$0xff]
        %v504 = vld [vmem:[%s148 + $0x478] sm:$0xff]
        %v505 = vld [vmem:[%s148 + $0x490] sm:$0xff]
        %v506 = vld [vmem:[%s148 + $0x498] sm:$0xff]
        %v507 = vld [vmem:[%s148 + $0x4b0] sm:$0xff]
        %v508 = vld [vmem:[%s148 + $0x4b8] sm:$0xff]
        %v509 = vld [vmem:[%s148 + $0x4d0] sm:$0xff]
        %v510 = vld [vmem:[%s148 + $0x4d8] sm:$0xff]
        %v511 = vld [vmem:[%s148 + $0x4f0] sm:$0xff]
        %v512 = vld [vmem:[%s148 + $0x4f8] sm:$0xff]
        %v513 = vld [vmem:[%s148 + $0x510] sm:$0xff]
        %v514 = vld [vmem:[%s148 + $0x518] sm:$0xff]
        %v515 = vld [vmem:[%s148 + $0x530] sm:$0xff]
        %v516 = vld [vmem:[%s148 + $0x538] sm:$0xff]
        %v517 = vld [vmem:[%s148 + $0x550] sm:$0xff]
        %v518 = vld [vmem:[%s148 + $0x558] sm:$0xff]
        %v519 = vld [vmem:[%s148 + $0x570] sm:$0xff]
        %v520 = vld [vmem:[%s148 + $0x578] sm:$0xff]
        %v521 = vld [vmem:[%s148 + $0x590] sm:$0xff]
        %v522 = vld [vmem:[%s148 + $0x598] sm:$0xff]
        %v523 = vld [vmem:[%s148 + $0x5b0] sm:$0xff]
        %v524 = vld [vmem:[%s148 + $0x5b8] sm:$0xff]
        %v525 = vld [vmem:[%s148 + $0x5d0] sm:$0xff]
        %v526 = vld [vmem:[%s148 + $0x5d8] sm:$0xff]
        %v527 = vld [vmem:[%s148 + $0x5f0] sm:$0xff]
        %v528 = vld [vmem:[%s148 + $0x5f8] sm:$0xff]
        %v529 = vld [vmem:[%s148 + $0x610] sm:$0xff]
        %v530 = vld [vmem:[%s148 + $0x618] sm:$0xff]
        %v531 = vld [vmem:[%s148 + $0x630] sm:$0xff]
        %v532 = vld [vmem:[%s148 + $0x638] sm:$0xff]
        %v533 = vld [vmem:[%s148 + $0x650] sm:$0xff]
        %v534 = vld [vmem:[%s148 + $0x658] sm:$0xff]
        %v535 = vld [vmem:[%s148 + $0x670] sm:$0xff]
        %v536 = vld [vmem:[%s148 + $0x678] sm:$0xff]
        %v537 = vld [vmem:[%s148 + $0x690] sm:$0xff]
        %v538 = vld [vmem:[%s148 + $0x698] sm:$0xff]
        %v539 = vld [vmem:[%s148 + $0x6b0] sm:$0xff]
        %v540 = vld [vmem:[%s148 + $0x6b8] sm:$0xff]
        %v541 = vld [vmem:[%s148 + $0x6d0] sm:$0xff]
        %v542 = vld [vmem:[%s148 + $0x6d8] sm:$0xff]
        %v543 = vld [vmem:[%s148 + $0x6f0] sm:$0xff]
        %v544 = vld [vmem:[%s148 + $0x6f8] sm:$0xff]
        %v545 = vld [vmem:[%s148 + $0x710] sm:$0xff]
        %v546 = vld [vmem:[%s148 + $0x718] sm:$0xff]
        %v547 = vld [vmem:[%s148 + $0x730] sm:$0xff]
        %v548 = vld [vmem:[%s148 + $0x738] sm:$0xff]
        %v549 = vld [vmem:[%s148 + $0x750] sm:$0xff]
        %v550 = vld [vmem:[%s148 + $0x758] sm:$0xff]
        %v551 = vld [vmem:[%s148 + $0x770] sm:$0xff]
        %v552 = vld [vmem:[%s148 + $0x778] sm:$0xff]
        %v553 = vld [vmem:[%s148 + $0x790] sm:$0xff]
        %v554 = vld [vmem:[%s148 + $0x798] sm:$0xff]
        %v555 = vld [vmem:[%s148 + $0x7b0] sm:$0xff]
        %v556 = vld [vmem:[%s148 + $0x7b8] sm:$0xff]
        %v557 = vld [vmem:[%s148 + $0x7d0] sm:$0xff]
        %v558 = vld [vmem:[%s148 + $0x7d8] sm:$0xff]
        %v559 = vld [vmem:[%s148 + $0x7f0] sm:$0xff]
        %v560 = vld [vmem:[%s148 + $0x7f8] sm:$0xff]
        %561 = vst [vmem:[%s173] sm:$0xff] %v433
        %562 = vst [vmem:[%s173 + $0x8] sm:$0xff] %v434
        %563 = vst [vmem:[%s173 + $0x10] sm:$0xff] %v435
        %564 = vst [vmem:[%s173 + $0x18] sm:$0xff] %v436
        %565 = vst [vmem:[%s173 + $0x20] sm:$0xff] %v437
        %566 = vst [vmem:[%s173 + $0x28] sm:$0xff] %v438
        %567 = vst [vmem:[%s173 + $0x30] sm:$0xff] %v439
        %568 = vst [vmem:[%s173 + $0x38] sm:$0xff] %v440
        %569 = vst [vmem:[%s173 + $0x40] sm:$0xff] %v441
        %570 = vst [vmem:[%s173 + $0x48] sm:$0xff] %v442
        %571 = vst [vmem:[%s173 + $0x50] sm:$0xff] %v443
        %572 = vst [vmem:[%s173 + $0x58] sm:$0xff] %v444
        %573 = vst [vmem:[%s173 + $0x60] sm:$0xff] %v445
        %574 = vst [vmem:[%s173 + $0x68] sm:$0xff] %v446
        %575 = vst [vmem:[%s173 + $0x70] sm:$0xff] %v447
        %576 = vst [vmem:[%s173 + $0x78] sm:$0xff] %v448
        %577 = vst [vmem:[%s173 + $0x80] sm:$0xff] %v449
        %578 = vst [vmem:[%s173 + $0x88] sm:$0xff] %v450
        %579 = vst [vmem:[%s173 + $0x90] sm:$0xff] %v451
        %580 = vst [vmem:[%s173 + $0x98] sm:$0xff] %v452
        %581 = vst [vmem:[%s173 + $0xa0] sm:$0xff] %v453
        %582 = vst [vmem:[%s173 + $0xa8] sm:$0xff] %v454
        %583 = vst [vmem:[%s173 + $0xb0] sm:$0xff] %v455
        %584 = vst [vmem:[%s173 + $0xb8] sm:$0xff] %v456
        %585 = vst [vmem:[%s173 + $0xc0] sm:$0xff] %v457
        %586 = vst [vmem:[%s173 + $0xc8] sm:$0xff] %v458
        %587 = vst [vmem:[%s173 + $0xd0] sm:$0xff] %v459
        %588 = vst [vmem:[%s173 + $0xd8] sm:$0xff] %v460
        %589 = vst [vmem:[%s173 + $0xe0] sm:$0xff] %v461
        %590 = vst [vmem:[%s173 + $0xe8] sm:$0xff] %v462
        %591 = vst [vmem:[%s173 + $0xf0] sm:$0xff] %v463
        %592 = vst [vmem:[%s173 + $0xf8] sm:$0xff] %v464
        %593 = vst [vmem:[%s173 + $0x100] sm:$0xff] %v465
        %594 = vst [vmem:[%s173 + $0x108] sm:$0xff] %v466
        %595 = vst [vmem:[%s173 + $0x110] sm:$0xff] %v467
        %596 = vst [vmem:[%s173 + $0x118] sm:$0xff] %v468
        %597 = vst [vmem:[%s173 + $0x120] sm:$0xff] %v469
        %598 = vst [vmem:[%s173 + $0x128] sm:$0xff] %v470
        %599 = vst [vmem:[%s173 + $0x130] sm:$0xff] %v471
        %600 = vst [vmem:[%s173 + $0x138] sm:$0xff] %v472
        %601 = vst [vmem:[%s173 + $0x140] sm:$0xff] %v473
        %602 = vst [vmem:[%s173 + $0x148] sm:$0xff] %v474
        %603 = vst [vmem:[%s173 + $0x150] sm:$0xff] %v475
        %604 = vst [vmem:[%s173 + $0x158] sm:$0xff] %v476
        %605 = vst [vmem:[%s173 + $0x160] sm:$0xff] %v477
        %606 = vst [vmem:[%s173 + $0x168] sm:$0xff] %v478
        %607 = vst [vmem:[%s173 + $0x170] sm:$0xff] %v479
        %608 = vst [vmem:[%s173 + $0x178] sm:$0xff] %v480
        %609 = vst [vmem:[%s173 + $0x180] sm:$0xff] %v481
        %610 = vst [vmem:[%s173 + $0x188] sm:$0xff] %v482
        %611 = vst [vmem:[%s173 + $0x190] sm:$0xff] %v483
        %612 = vst [vmem:[%s173 + $0x198] sm:$0xff] %v484
        %613 = vst [vmem:[%s173 + $0x1a0] sm:$0xff] %v485
        %614 = vst [vmem:[%s173 + $0x1a8] sm:$0xff] %v486
        %615 = vst [vmem:[%s173 + $0x1b0] sm:$0xff] %v487
        %616 = vst [vmem:[%s173 + $0x1b8] sm:$0xff] %v488
        %617 = vst [vmem:[%s173 + $0x1c0] sm:$0xff] %v489
        %618 = vst [vmem:[%s173 + $0x1c8] sm:$0xff] %v490
        %619 = vst [vmem:[%s173 + $0x1d0] sm:$0xff] %v491
        %620 = vst [vmem:[%s173 + $0x1d8] sm:$0xff] %v492
        %621 = vst [vmem:[%s173 + $0x1e0] sm:$0xff] %v493
        %622 = vst [vmem:[%s173 + $0x1e8] sm:$0xff] %v494
        %623 = vst [vmem:[%s173 + $0x1f0] sm:$0xff] %v495
        %624 = vst [vmem:[%s173 + $0x1f8] sm:$0xff] %v496
        %625 = vst [vmem:[%s173 + $0x200] sm:$0xff] %v497
        %626 = vst [vmem:[%s173 + $0x208] sm:$0xff] %v498
        %627 = vst [vmem:[%s173 + $0x210] sm:$0xff] %v499
        %628 = vst [vmem:[%s173 + $0x218] sm:$0xff] %v500
        %629 = vst [vmem:[%s173 + $0x220] sm:$0xff] %v501
        %630 = vst [vmem:[%s173 + $0x228] sm:$0xff] %v502
        %631 = vst [vmem:[%s173 + $0x230] sm:$0xff] %v503
        %632 = vst [vmem:[%s173 + $0x238] sm:$0xff] %v504
        %633 = vst [vmem:[%s173 + $0x240] sm:$0xff] %v505
        %634 = vst [vmem:[%s173 + $0x248] sm:$0xff] %v506
        %635 = vst [vmem:[%s173 + $0x250] sm:$0xff] %v507
        %636 = vst [vmem:[%s173 + $0x258] sm:$0xff] %v508
        %637 = vst [vmem:[%s173 + $0x260] sm:$0xff] %v509
        %638 = vst [vmem:[%s173 + $0x268] sm:$0xff] %v510
        %639 = vst [vmem:[%s173 + $0x270] sm:$0xff] %v511
        %640 = vst [vmem:[%s173 + $0x278] sm:$0xff] %v512
        %641 = vst [vmem:[%s173 + $0x280] sm:$0xff] %v513
        %642 = vst [vmem:[%s173 + $0x288] sm:$0xff] %v514
        %643 = vst [vmem:[%s173 + $0x290] sm:$0xff] %v515
        %644 = vst [vmem:[%s173 + $0x298] sm:$0xff] %v516
        %645 = vst [vmem:[%s173 + $0x2a0] sm:$0xff] %v517
        %646 = vst [vmem:[%s173 + $0x2a8] sm:$0xff] %v518
        %647 = vst [vmem:[%s173 + $0x2b0] sm:$0xff] %v519
        %648 = vst [vmem:[%s173 + $0x2b8] sm:$0xff] %v520
        %649 = vst [vmem:[%s173 + $0x2c0] sm:$0xff] %v521
        %650 = vst [vmem:[%s173 + $0x2c8] sm:$0xff] %v522
        %651 = vst [vmem:[%s173 + $0x2d0] sm:$0xff] %v523
        %652 = vst [vmem:[%s173 + $0x2d8] sm:$0xff] %v524
        %653 = vst [vmem:[%s173 + $0x2e0] sm:$0xff] %v525
        %654 = vst [vmem:[%s173 + $0x2e8] sm:$0xff] %v526
        %655 = vst [vmem:[%s173 + $0x2f0] sm:$0xff] %v527
        %656 = vst [vmem:[%s173 + $0x2f8] sm:$0xff] %v528
        %657 = vst [vmem:[%s173 + $0x300] sm:$0xff] %v529
        %658 = vst [vmem:[%s173 + $0x308] sm:$0xff] %v530
        %659 = vst [vmem:[%s173 + $0x310] sm:$0xff] %v531
        %660 = vst [vmem:[%s173 + $0x318] sm:$0xff] %v532
        %661 = vst [vmem:[%s173 + $0x320] sm:$0xff] %v533
        %662 = vst [vmem:[%s173 + $0x328] sm:$0xff] %v534
        %663 = vst [vmem:[%s173 + $0x330] sm:$0xff] %v535
        %664 = vst [vmem:[%s173 + $0x338] sm:$0xff] %v536
        %665 = vst [vmem:[%s173 + $0x340] sm:$0xff] %v537
        %666 = vst [vmem:[%s173 + $0x348] sm:$0xff] %v538
        %667 = vst [vmem:[%s173 + $0x350] sm:$0xff] %v539
        %668 = vst [vmem:[%s173 + $0x358] sm:$0xff] %v540
        %669 = vst [vmem:[%s173 + $0x360] sm:$0xff] %v541
        %670 = vst [vmem:[%s173 + $0x368] sm:$0xff] %v542
        %671 = vst [vmem:[%s173 + $0x370] sm:$0xff] %v543
        %672 = vst [vmem:[%s173 + $0x378] sm:$0xff] %v544
        %673 = vst [vmem:[%s173 + $0x380] sm:$0xff] %v545
        %674 = vst [vmem:[%s173 + $0x388] sm:$0xff] %v546
        %675 = vst [vmem:[%s173 + $0x390] sm:$0xff] %v547
        %676 = vst [vmem:[%s173 + $0x398] sm:$0xff] %v548
        %677 = vst [vmem:[%s173 + $0x3a0] sm:$0xff] %v549
        %678 = vst [vmem:[%s173 + $0x3a8] sm:$0xff] %v550
        %679 = vst [vmem:[%s173 + $0x3b0] sm:$0xff] %v551
        %680 = vst [vmem:[%s173 + $0x3b8] sm:$0xff] %v552
        %681 = vst [vmem:[%s173 + $0x3c0] sm:$0xff] %v553
        %682 = vst [vmem:[%s173 + $0x3c8] sm:$0xff] %v554
        %683 = vst [vmem:[%s173 + $0x3d0] sm:$0xff] %v555
        %684 = vst [vmem:[%s173 + $0x3d8] sm:$0xff] %v556
        %685 = vst [vmem:[%s173 + $0x3e0] sm:$0xff] %v557
        %686 = vst [vmem:[%s173 + $0x3e8] sm:$0xff] %v558
        %687 = vst [vmem:[%s173 + $0x3f0] sm:$0xff] %v559
        %688 = vst [vmem:[%s173 + $0x3f8] sm:$0xff] %v560
        %s689 = sand.u32 %s57, 1
        %s690 = scalar_lea.sflag [#allocation4], %s689
        %s691 = sand.u32 %s57, 1
        %s692 = smul.addr %s691, 1024
        %s693 = scalar_lea.vmem [#allocation5], %s692
        %s694 = sand.u32 %s83, 1
        %s695 = scalar_lea.sflag [#allocation7], %s694
        %s696 = sand.u32 %s83, 1
        %s697 = smul.addr %s696, 1024
        %s698 = scalar_lea.vmem [#allocation6], %s697
        // Predicated region
        $region29: #{tpu_custom_call.1} parent=23 // pred_check
          %p699 = pneg %p67
        $region30: #{tpu_custom_call.1} parent=23 // pred_check_branch
          %701 = sbr.rel (%p699) target = $region32
        $region31: #{tpu_custom_call.1} parent=23 // pred_region
          %s702 = smul.u32 64, %s23
          %s704 = ssub.s32 16384, 16384
          %705 = vsyncadd %s690, %s704
          %s706 = smul.addr %s702, 2
          %s707 = smul.addr %s706, 128
          %s708 = scalar_lea.hbm %s1, %s707
          %s709 = sshll.u32 %s693, 4
          %s710 = int_to_ptr.vmem [resolvable:$true] %s709
          %715 = dma.vmem_to_hbm [thread:$0]  %s710, 16384, %s708, %s690, 256, 256, 16
        $region32: #{tpu_custom_call.1} parent=23 // pred_fallthru
          _
        // Predicated region
        $region33: #{tpu_custom_call.1} parent=23 // pred_check
          %p716 = pneg %p93
        $region34: #{tpu_custom_call.1} parent=23 // pred_check_branch
          %718 = sbr.rel (%p716) target = $region36
        $region35: #{tpu_custom_call.1} parent=23 // pred_region
          %s719 = smul.u32 64, %s23
          %s721 = ssub.s32 16384, 16384
          %722 = vsyncadd %s695, %s721
          %s723 = smul.addr %s719, 2
          %s724 = smul.addr %s723, 128
          %s725 = scalar_lea.hbm %s2, %s724
          %s726 = sshll.u32 %s698, 4
          %s727 = int_to_ptr.vmem [resolvable:$true] %s726
          %732 = dma.vmem_to_hbm [thread:$0]  %s727, 16384, %s725, %s695, 256, 256, 16
        $region36: #{tpu_custom_call.1} parent=23 // pred_fallthru
          _
      $region24: #{tpu_custom_call.1} parent=5 // pred_fallthru
        _
      %p733 = scmp.le.s32.totalorder 2, %s18
      // Predicated region
      $region37: #{tpu_custom_call.1} parent=5 // pred_check
        %p734 = pneg %p733
      $region38: #{tpu_custom_call.1} parent=5 // pred_check_branch
        %736 = sbr.rel (%p734) target = $region40
      $region39: #{tpu_custom_call.1} parent=5 // pred_region
        %s737 = ssub.s32 %s18, 2
        // Predicated region
        $region41: #{tpu_custom_call.1} parent=39 // pred_check
          %p738 = pneg %p73
        $region42: #{tpu_custom_call.1} parent=39 // pred_check_branch
          %740 = sbr.rel (%p738) target = $region44
        $region43: #{tpu_custom_call.1} parent=39 // pred_region
          %s741 = sand.u32 %s58, 1
          %s742 = scalar_lea.sflag [#allocation4], %s741
          %s743 = sand.u32 %s58, 1
          %s744 = smul.addr %s743, 1024
          %s745 = scalar_lea.vmem [#allocation5], %s744
          %746 = dma.done %s742, 16384
        $region44: #{tpu_custom_call.1} parent=39 // pred_fallthru
          _
        // Predicated region
        $region45: #{tpu_custom_call.1} parent=39 // pred_check
          %p747 = pneg %p99
        $region46: #{tpu_custom_call.1} parent=39 // pred_check_branch
          %749 = sbr.rel (%p747) target = $region48
        $region47: #{tpu_custom_call.1} parent=39 // pred_region
          %s750 = sand.u32 %s84, 1
          %s751 = scalar_lea.sflag [#allocation7], %s750
          %s752 = sand.u32 %s84, 1
          %s753 = smul.addr %s752, 1024
          %s754 = scalar_lea.vmem [#allocation6], %s753
          %755 = dma.done %s751, 16384
        $region48: #{tpu_custom_call.1} parent=39 // pred_fallthru
          _
      $region40: #{tpu_custom_call.1} parent=5 // pred_fallthru
        _
    $region6: #{tpu_custom_call.1} parent=1 // loop_footer
      %s22 = sadd.s32 1, %s18
    $region7: #{tpu_custom_call.1} parent=1 // loop_footer_branch
      %17 = sbr.rel target = $region3
    $region8: #{tpu_custom_call.1} parent=1 // loop_exit
      _
    %756 = vsyncpa [#allocation3], 1
    %s757 = scalar_lea.sflag [#allocation3], 1
    %758 = vsyncpa %s757, 1
    %759 = vsyncpa [#allocation4], 1
    %s760 = scalar_lea.sflag [#allocation4], 1
    %761 = vsyncpa %s760, 1
    %762 = vsyncpa [#allocation7], 1
    %s763 = scalar_lea.sflag [#allocation7], 1
    %764 = vsyncpa %s763, 1

</llo_original>
